<compile_context>
chip_gen: v5e
topology: v5e:2x2
jax: 0.10.0
libtpu: 0.0.40
codegen_flags: <defaults>
</compile_context>

<pallas_src>
import jax
import jax.numpy as jnp
import numpy as np
from jax.experimental import pallas as pl
from jax.experimental.pallas import tpu as pltpu

BLANK_ID = 0


def _greedy_argmax_kernel(logits_ref, best_ref):
    """One (batch, time-tile) block: per-frame argmax over the vocab axis.

    logits_ref : (1, tT, V) VMEM, any float dtype (f32 or bf16)
    best_ref   : (1, 1, tT) VMEM int32 (time on the lane axis -> unmasked vst)
    """
    x = logits_ref[...]                                    # (1, tT, V)
    vocab = x.shape[-1]
    # argmax(x) == argmax(log_softmax(x / tmp)) for tmp > 0, so compare on the
    # raw logits: one cross-lane max + one cross-lane masked-min, no EUP work.
    m = jnp.max(x, axis=-1, keepdims=True)                 # XLU reduce #1
    ids = jax.lax.broadcasted_iota(jnp.int32, x.shape, dimension=2)
    # First max wins (== torch.argmax first-occurrence tie-breaking).
    # NOTE: an all-NaN frame makes the mask all-False and yields the sentinel
    # `vocab` (torch would return the NaN index); harmless for finite inputs.
    cand = jnp.where(x >= m, ids, jnp.int32(vocab))
    best = jnp.min(cand, axis=-1)                          # XLU reduce #2, (1, tT)
    best_ref[...] = best.reshape(best_ref.shape)


def _choose_time_tile(T, V, itemsize, budget_bytes):
    """Largest time tile whose double-buffered (1, tT, V) input block fits budget."""
    rows = budget_bytes // (2 * V * itemsize)
    if rows >= T:
        return T
    # When tiling, tT must be a multiple of 128 so the lane-dense token output
    # block (1, 1, tT) satisfies the lane tiling constraint (and this also
    # covers the multiple-of-8 sublane constraint of the (1, tT, V) input).
    return max(128, (rows // 128) * 128)


def ctc_greedy_best_tokens(logits, *, time_tile=None, vmem_budget_bytes=16 << 20):
    """Per-frame best token ids (greedy CTC path). Returns int32 [B, T]."""
    B, T, V = logits.shape
    itemsize = jnp.dtype(logits.dtype).itemsize
    tT = (_choose_time_tile(T, V, itemsize, vmem_budget_bytes)
          if time_tile is None else int(time_tile))
    if tT != T and tT % 128 != 0:
        raise ValueError("time_tile must equal T or be a multiple of 128")
    n_t = pl.cdiv(T, tT)

    in_block_bytes = tT * V * itemsize
    # Raise the scoped VMEM limit to cover the double-buffered input block plus
    # headroom (>= the default on every generation; the tile chooser keeps the
    # footprint v7x-safe for realistic vocab sizes).
    vmem_limit = int(min(120 << 20, max(32 << 20, 2 * in_block_bytes + (4 << 20))))

    best = pl.pallas_call(
        _greedy_argmax_kernel,
        out_shape=jax.ShapeDtypeStruct((B, 1, T), jnp.int32),
        grid_spec=pltpu.PrefetchScalarGridSpec(
            num_scalar_prefetch=0,
            grid=(B, n_t),
            in_specs=[pl.BlockSpec((1, tT, V), lambda b, t: (b, t, 0))],
            out_specs=pl.BlockSpec((1, 1, tT), lambda b, t: (b, 0, t)),
        ),
        compiler_params=pltpu.CompilerParams(
            dimension_semantics=("parallel", "parallel"),
            vmem_limit_bytes=vmem_limit,
        ),
    )(logits)
    return best[:, 0, :]                                   # (B, T)


def ctc_collapse(best_tokens, logits_len, blank_id=BLANK_ID):
    """Host-side: trim to length, unique_consecutive, drop blanks (vectorized)."""
    best = np.asarray(best_tokens)            # (B, T)
    lens = np.asarray(logits_len)
    out = []
    for b in range(best.shape[0]):
        seq = best[b, : int(lens[b])]
        if seq.size == 0:
            out.append([])
            continue
        keep = np.empty(seq.shape, dtype=bool)
        keep[0] = True
        keep[1:] = seq[1:] != seq[:-1]        # torch.unique_consecutive
        keep &= seq != blank_id               # drop blank tokens
        out.append([int(t) for t in seq[keep]])
    return out


class CTCGreedySearchDecoderPallas:
    """JAX/Pallas stand-in for the PyTorch CTCGreedySearchDecoder.

    The per-frame argmax (the only tensor compute in greedy_search) runs in a
    Pallas TPU kernel; length-trim + unique_consecutive + blank removal are
    ragged host-side glue.
    """

    def __init__(self, tokenizer_path=None, blank_token=0):
        # TODO(synk): SentencePieceProcessor text decoding (tokenizer.decode)
        # has no Pallas equivalent; this class returns collapsed token-id lists.
        self.tokenizer_path = tokenizer_path
        self.blank_token = blank_token

    def greedy_search(self, logits, logits_len):
        best = ctc_greedy_best_tokens(logits)
        jax.block_until_ready(best)
        return ctc_collapse(best, logits_len, blank_id=self.blank_token)

    def forward(self, outputs, from_logits=True):
        if from_logits:
            return self.greedy_search(*outputs)
        return [int(t) for t in np.asarray(outputs[0]).reshape(-1).tolist()]

    __call__ = forward


if __name__ == "__main__":
    key = jax.random.PRNGKey(0)
    k1, k2 = jax.random.split(key)

    # Small shapes matching the module's (B, T, V) logits convention.
    B, T, V = 2, 16, 128
    logits = jax.random.normal(k1, (B, T, V), dtype=jnp.float32)
    logits_len = jnp.array([16, 12], dtype=jnp.int32)

    decoder = CTCGreedySearchDecoderPallas(blank_token=BLANK_ID)
    tokens = decoder.forward((logits, logits_len), from_logits=True)

    # Reference: torch semantics = argmax -> trim -> unique_consecutive -> drop blank.
    ref_best = np.argmax(np.asarray(logits), axis=-1)
    ref_tokens = []
    for b in range(B):
        seq = ref_best[b, : int(logits_len[b])]
        collapsed, prev = [], None
        for tok in seq.tolist():
            if tok != prev and tok != BLANK_ID:
                collapsed.append(int(tok))
            prev = tok
        ref_tokens.append(collapsed)
    assert tokens == ref_tokens, (tokens, ref_tokens)

    # Kernel argmax vs reference argmax.
    kern_best = ctc_greedy_best_tokens(logits)
    jax.block_until_ready(kern_best)
    np.testing.assert_array_equal(np.asarray(kern_best), ref_best)

    # Exercise the time-tiled path (grid = (B, nT) with nT > 1).
    T2 = 256
    logits2 = jax.random.normal(k2, (B, T2, V), dtype=jnp.float32)
    kern_best2 = ctc_greedy_best_tokens(logits2, time_tile=128)
    jax.block_until_ready(kern_best2)
    np.testing.assert_array_equal(
        np.asarray(kern_best2), np.argmax(np.asarray(logits2), axis=-1)
    )

    print("KERNEL_OK")
</pallas_src>

<mosaic_0001>
module attributes {stable_mosaic.version = 11 : i64} {
  func.func @_greedy_argmax_kernel(%arg0: i32, %arg1: i32, %arg2: memref<1x16x128xf32, #tpu.memory_space<vmem>>, %arg3: memref<1x1x16xi32, #tpu.memory_space<vmem>>) attributes {dimension_semantics = [#tpu.dimension_semantics<parallel>, #tpu.dimension_semantics<parallel>], iteration_bounds = array<i64: 2, 1>, scalar_prefetch = 0 : i64, scratch_operands = 0 : i64, tpu.core_type = #tpu.core_type<tc>, window_params = [{transform_indices = @transform_0, window_bounds = array<i64: 1, 16, 128>}, {transform_indices = @transform_1, window_bounds = array<i64: 1, 1, 16>}]} {
    %c0 = arith.constant 0 : index
    %c0_0 = arith.constant 0 : index
    %c0_1 = arith.constant 0 : index
    %0 = vector.load %arg2[%c0, %c0_0, %c0_1] : memref<1x16x128xf32, #tpu.memory_space<vmem>>, vector<1x16x128xf32>
    %cst = arith.constant dense<0xFF800000> : vector<1x16xf32>
    %1 = vector.multi_reduction <maximumf>, %0, %cst [2] : vector<1x16x128xf32> to vector<1x16xf32>
    %2 = vector.shape_cast %1 : vector<1x16xf32> to vector<1x16x1xf32>
    %3 = tpu.iota {dimensions = array<i32: 2>} : vector<1x16x128xi32>
    %4 = vector.broadcast %2 : vector<1x16x1xf32> to vector<1x16x128xf32>
    %5 = arith.cmpf oge, %0, %4 : vector<1x16x128xf32>
    %c128_i32 = arith.constant 128 : i32
    %6 = vector.broadcast %c128_i32 : i32 to vector<1x16x128xi32>
    %7 = arith.select %5, %3, %6 : vector<1x16x128xi1>, vector<1x16x128xi32>
    %cst_2 = arith.constant dense<2147483647> : vector<1x16xi32>
    %8 = vector.multi_reduction <minsi>, %7, %cst_2 [2] : vector<1x16x128xi32> to vector<1x16xi32>
    %9 = vector.shape_cast %8 : vector<1x16xi32> to vector<1x1x16xi32>
    %c0_3 = arith.constant 0 : index
    %c0_4 = arith.constant 0 : index
    %c0_5 = arith.constant 0 : index
    %10 = vector.load %arg3[%c0_3, %c0_4, %c0_5] : memref<1x1x16xi32, #tpu.memory_space<vmem>>, vector<1x1x16xi32>
    tpu.vector_store %arg3[%c0_3, %c0_4, %c0_5], %9 {strides = array<i32>} : memref<1x1x16xi32, #tpu.memory_space<vmem>>, vector<1x1x16xi32>,
    return
  }
  func.func @transform_0(%arg0: i32, %arg1: i32) -> (i32, i32, i32) {
    %c0_i32 = arith.constant 0 : i32
    %c0_i32_0 = arith.constant 0 : i32
    return %arg0, %arg1, %c0_i32 : i32, i32, i32
  }
  func.func @transform_1(%arg0: i32, %arg1: i32) -> (i32, i32, i32) {
    %c0_i32 = arith.constant 0 : i32
    %c0_i32_0 = arith.constant 0 : i32
    return %arg0, %c0_i32, %arg1 : i32, i32, i32
  }
}

</mosaic_0001>

<llo_original>
// kernel: tpu_custom_call.1
$region0: #{tpu_custom_call.1}
  #allocation0 [shape = 'u32[]', space=smem, size = 0x4, offset = 0x4, fixed_abs, tag = 'smem constant byte address 0x4 - core index']
  #allocation1 [shape = 'u32[72,128]{1,0:T(1,128)}', space=vmem, size = 0x9000, scoped, tag = 'internal scratch']
  %s0 = inlined_call_operand.hbm [shape: f32[2,16,128], index: 0, kind: input, shape index: {}]
  %s1 = inlined_call_operand.hbm [shape: s32[2,1,16], index: 1, kind: output, shape index: {}]
  %s2 = sld [smem:[#allocation0]]
  $region41: #{tpu_custom_call.1} parent=0
    _
  %s4 = ssub.s32 1, %s2
  %s5 = scalar_select 0, %s4, %s2
  $region1: #{tpu_custom_call.1} parent=0
    #allocation2 [shape = 'u8[16384]{0}', space=vmem, size = 0x4000, scoped, tag = 'input window, operand 0']
    #allocation3 [shape = 's32[2]{0}', space=sflag, size = 0x8, scoped, tag = 'scoped memory for tpu_custom_call.1']
    #allocation4 [shape = 's32[2]{0}', space=sflag, size = 0x8, scoped, tag = 'scoped memory for tpu_custom_call.1']
    #allocation5 [shape = 'u8[1024]{0}', space=vmem, size = 0x400, scoped, tag = 'output window, operand 0']
    %6 = vsyncpa [#allocation3], 0
    %s7 = scalar_lea.sflag [#allocation3], 1
    %8 = vsyncpa %s7, 0
    %9 = vsyncpa [#allocation4], 0
    %s10 = scalar_lea.sflag [#allocation4], 1
    %11 = vsyncpa %s10, 0
    loop: start=0, step=1, limit=4
    $region2: #{tpu_custom_call.1} parent=1 // loop_pre_header
      _
    $region3: #{tpu_custom_call.1} parent=1 // loop_header
      %s13 = sphi 0, %s17
      %p14 = scmp.ge.s32.totalorder %s13, 4
      %s20 = sphi 0, %s32
      %s21 = sphi 0, %s28
      %s22 = sphi 0, %s20
      %s23 = sphi 0, %s21
      %s24 = sphi 0, %s22
      %s25 = sphi 0, %s23
      %s37 = sphi 0, %s39
      %s40 = sphi 0, %s37
      %s41 = sphi 0, %s40
      %s57 = sphi 0, %s41
      %s65 = sphi 0, %s67
      %s68 = sphi 0, %s65
      %s69 = sphi 0, %s68
      %s85 = sphi 0, %s69
    $region4: #{tpu_custom_call.1} parent=1 // loop_header_branch
      %16 = sbr.rel (%p14) target = $region8
    $region5: #{tpu_custom_call.1} parent=1 // loop_body
      %s18 = ssub.s32 %s13, 1
      %s19 = ssub.s32 %s13, 2
      %s26 = sadd.s32 1, %s21
      %p27 = scmp.ge.s32.totalorder %s26, 1
      %s28 = scalar_select %p27, 0, %s26
      %s29 = sadd.s32 1, %s20
      %s30 = scalar_select %p27, %s29, %s20
      %p31 = scmp.ge.s32.totalorder %s30, 2
      %s32 = scalar_select %p31, 0, %s30
      %s33 = ssub.s32 %s20, %s32
      %s34 = ssub.s32 %s21, %s28
      %s35 = sor.u32 %s33, %s34
      %p36 = scmp.eq.s32.totalorder %s35, 0
      %s38 = sadd.s32 %s37, 1
      %s39 = scalar_select %p36, %s37, %s38
      %p42 = pneg %p36
      %p43 = scmp.eq.s32.totalorder %s13, 1
      %p44 = por %p42, %p43
      %p45 = scmp.ne.s32.totalorder %s37, %s40
      %p46 = scmp.eq.s32.totalorder %s13, 0
      %p47 = por %p45, %p46
      %p48 = scmp.ne.s32.totalorder %s37, %s40
      %p49 = scmp.eq.s32.totalorder %s18, 1
      %p50 = por %p48, %p49
      %p51 = scmp.ne.s32.totalorder %s40, %s41
      %p52 = scmp.eq.s32.totalorder %s18, 0
      %p53 = por %p51, %p52
      %p54 = scmp.ne.s32.totalorder %s40, %s41
      %p55 = scmp.eq.s32.totalorder %s19, 1
      %p56 = por %p54, %p55
      %p58 = scmp.ne.s32.totalorder %s41, %s57
      %p59 = scmp.eq.s32.totalorder %s19, 0
      %p60 = por %p58, %p59
      %s61 = ssub.s32 %s20, %s32
      %s62 = ssub.s32 %s21, %s28
      %s63 = sor.u32 %s61, %s62
      %p64 = scmp.eq.s32.totalorder %s63, 0
      %s66 = sadd.s32 %s65, 1
      %s67 = scalar_select %p64, %s65, %s66
      %p70 = pneg %p64
      %p71 = scmp.eq.s32.totalorder %s13, 1
      %p72 = por %p70, %p71
      %p73 = scmp.ne.s32.totalorder %s65, %s68
      %p74 = scmp.eq.s32.totalorder %s13, 0
      %p75 = por %p73, %p74
      %p76 = scmp.ne.s32.totalorder %s65, %s68
      %p77 = scmp.eq.s32.totalorder %s18, 1
      %p78 = por %p76, %p77
      %p79 = scmp.ne.s32.totalorder %s68, %s69
      %p80 = scmp.eq.s32.totalorder %s18, 0
      %p81 = por %p79, %p80
      %p82 = scmp.ne.s32.totalorder %s68, %s69
      %p83 = scmp.eq.s32.totalorder %s19, 1
      %p84 = por %p82, %p83
      %p86 = scmp.ne.s32.totalorder %s69, %s85
      %p87 = scmp.eq.s32.totalorder %s19, 0
      %p88 = por %p86, %p87
      %p89 = scmp.le.s32.totalorder 1, %s13
      %p90 = scmp.lt.s32.totalorder %s13, 3
      %p91 = pnand %p89, %p90
      %p92 = pneg %p91
      // Predicated region
      $region9: #{tpu_custom_call.1} parent=5 // pred_check
        _
      $region10: #{tpu_custom_call.1} parent=5 // pred_check_branch
        %94 = sbr.rel (%p91) target = $region12
      $region11: #{tpu_custom_call.1} parent=5 // pred_region
        %s95 = ssub.s32 %s13, 1
      $region12: #{tpu_custom_call.1} parent=5 // pred_fallthru
        _
      %p96 = scmp.lt.s32.totalorder %s13, 2
      // Predicated region
      $region13: #{tpu_custom_call.1} parent=5 // pred_check
        %p97 = pneg %p96
      $region14: #{tpu_custom_call.1} parent=5 // pred_check_branch
        %99 = sbr.rel (%p97) target = $region16
      $region15: #{tpu_custom_call.1} parent=5 // pred_region
        // Predicated region
        $region17: #{tpu_custom_call.1} parent=15 // pred_check
          %p100 = pneg %p47
        $region18: #{tpu_custom_call.1} parent=15 // pred_check_branch
          %102 = sbr.rel (%p100) target = $region20
        $region19: #{tpu_custom_call.1} parent=15 // pred_region
          %s103 = sand.u32 %s37, 1
          %s104 = scalar_lea.sflag [#allocation3], %s103
          %s105 = sand.u32 %s37, 1
          %s106 = smul.addr %s105, 16
          %s107 = scalar_lea.vmem [#allocation2], %s106
          %s108 = smul.u32 2, %s21
          %110 = vsyncadd %s104, 0
          %s111 = smul.addr %s20, 2
          %s112 = sadd.s32 %s108, %s111
          %s113 = smul.addr %s112, 8
          %s114 = scalar_lea.hbm %s0, %s113
          %s115 = sshll.u32 %s114, 4
          %s116 = int_to_ptr.hbm [resolvable:$true] %s115
          %s117 = sshll.u32 %s107, 4
          %s118 = int_to_ptr.vmem [resolvable:$true] %s117
          %123 = dma.hbm_to_vmem [thread:$0]  %s116, 256, %s118, %s104, 128, 128, 8
        $region20: #{tpu_custom_call.1} parent=15 // pred_fallthru
          _
      $region16: #{tpu_custom_call.1} parent=5 // pred_fallthru
        _
      %p124 = scmp.le.s32.totalorder 1, %s13
      %p125 = scmp.lt.s32.totalorder %s13, 3
      %p126 = pnand %p124, %p125
      %p127 = pneg %p126
      // Predicated region
      $region21: #{tpu_custom_call.1} parent=5 // pred_check
        _
      $region22: #{tpu_custom_call.1} parent=5 // pred_check_branch
        %129 = sbr.rel (%p126) target = $region24
      $region23: #{tpu_custom_call.1} parent=5 // pred_region
        %s130 = ssub.s32 %s13, 1
        %s131 = sand.u32 %s40, 1
        %s132 = scalar_lea.sflag [#allocation3], %s131
        %s133 = sand.u32 %s40, 1
        %s134 = smul.addr %s133, 16
        %s135 = scalar_lea.vmem [#allocation2], %s134
        // Predicated region
        $region25: #{tpu_custom_call.1} parent=23 // pred_check
          %p136 = pneg %p53
        $region26: #{tpu_custom_call.1} parent=23 // pred_check_branch
          %138 = sbr.rel (%p136) target = $region28
        $region27: #{tpu_custom_call.1} parent=23 // pred_region
          %140 = dma.done %s132, 256
        $region28: #{tpu_custom_call.1} parent=23 // pred_fallthru
          _
        %s141 = sand.u32 %s40, 1
        %s142 = scalar_lea.sflag [#allocation3], %s141
        %s143 = sand.u32 %s40, 1
        %s144 = smul.addr %s143, 16
        %s145 = scalar_lea.vmem [#allocation2], %s144
        %p146 = pneg %p53
        %p147 = pneg %p50
        %p148 = pneg %p81
        %p149 = pneg %p78
        %s150 = sand.u32 %s68, 1
        %s151 = scalar_lea.sflag [#allocation4], %s150
        %s152 = sand.u32 %s68, 1
        %s153 = scalar_lea.vmem [#allocation5], %s152
        %s154 = smul.u32 2, %s23
        %v155 = vld [vmem:[%s135] sm:$0xff]
        %v156 = vld [vmem:[%s135 + $0x8] sm:$0xff]
        %157 = vmax.xlane.f32.xlu0 %v155
        %v158 = vpop.xlane.xlu0 %157
        %159 = vmax.xlane.f32.xlu0 %v156
        %v160 = vpop.xlane.xlu0 %159
        %v161 = vlaneseq
        %v162 = vand.u32 %v161, 127
        %vm163 = vcmp.ge.f32.partialorder %v155, %v158
        %vm164 = vcmp.ge.f32.partialorder %v156, %v160
        %v165 = vsel %vm163, %v162, 128
        %v166 = vsel %vm164, %v162, 128
        %v167 = vand.u32 %v165, 65535
        %v168 = vshra.s32 %v165, 16
        %v169 = vcvt.s32.f32 %v167
        %v170 = vcvt.s32.f32 %v168
        %171 = vmin.xlane.f32.xlu0 %v170
        %v172 = vpop.xlane.xlu0 %171
        %vm173 = vcmp.eq.f32.partialorder %v170, %v172
        %v174 = vsel %vm173, %v169, inf
        %175 = vmin.xlane.f32.xlu0 %v174
        %v176 = vpop.xlane.xlu0 %175
        %v177 = vcvt.f32.s32 %v176
        %v178 = vcvt.f32.s32 %v172
        %v179 = vshll.u32 %v178, 16
        %v180 = vadd.s32 %v179, %v177
        %v181 = vand.u32 %v166, 65535
        %v182 = vshra.s32 %v166, 16
        %v183 = vcvt.s32.f32 %v181
        %v184 = vcvt.s32.f32 %v182
        %185 = vmin.xlane.f32.xlu0 %v184
        %v186 = vpop.xlane.xlu0 %185
        %vm187 = vcmp.eq.f32.partialorder %v184, %v186
        %v188 = vsel %vm187, %v183, inf
        %189 = vmin.xlane.f32.xlu0 %v188
        %v190 = vpop.xlane.xlu0 %189
        %v191 = vcvt.f32.s32 %v190
        %v192 = vcvt.f32.s32 %v186
        %v193 = vshll.u32 %v192, 16
        %v194 = vadd.s32 %v193, %v191
        %v195 = vperm.slane %v180, %v162
        %v196 = vadd.s32 %v162, 4294967288
        %v197 = vperm.slane %v194, %v196
        %vm198 = vcmask 130112
        %v199 = vsel %vm198, %v197, %v195
        %vm200 = vcmask 122880
        %201 = vst.msk [vmem:[%s153] sm:$0x1] %vm200, %v199
        %s202 = sand.u32 %s68, 1
        %s203 = scalar_lea.sflag [#allocation4], %s202
        %s204 = sand.u32 %s68, 1
        %s205 = scalar_lea.vmem [#allocation5], %s204
        // Predicated region
        $region29: #{tpu_custom_call.1} parent=23 // pred_check
          %p206 = pneg %p78
        $region30: #{tpu_custom_call.1} parent=23 // pred_check_branch
          %208 = sbr.rel (%p206) target = $region32
        $region31: #{tpu_custom_call.1} parent=23 // pred_region
          %210 = vsyncadd %s203, 0
          %s211 = sadd.s32 %s23, %s22
          %s212 = scalar_lea.hbm %s1, %s211
          %s214 = sshll.u32 %s205, 4
          %s215 = int_to_ptr.vmem [resolvable:$true] %s214
          %s216 = sshll.u32 %s212, 4
          %s217 = int_to_ptr.hbm [resolvable:$true] %s216
          %219 = dma.vmem_to_hbm [thread:$0]  %s215, 16, %s217, %s203
        $region32: #{tpu_custom_call.1} parent=23 // pred_fallthru
          _
      $region24: #{tpu_custom_call.1} parent=5 // pred_fallthru
        _
      %p220 = scmp.le.s32.totalorder 2, %s13
      // Predicated region
      $region33: #{tpu_custom_call.1} parent=5 // pred_check
        %p221 = pneg %p220
      $region34: #{tpu_custom_call.1} parent=5 // pred_check_branch
        %223 = sbr.rel (%p221) target = $region36
      $region35: #{tpu_custom_call.1} parent=5 // pred_region
        %s224 = ssub.s32 %s13, 2
        // Predicated region
        $region37: #{tpu_custom_call.1} parent=35 // pred_check
          %p225 = pneg %p84
        $region38: #{tpu_custom_call.1} parent=35 // pred_check_branch
          %227 = sbr.rel (%p225) target = $region40
        $region39: #{tpu_custom_call.1} parent=35 // pred_region
          %s228 = sand.u32 %s69, 1
          %s229 = scalar_lea.sflag [#allocation4], %s228
          %s230 = sand.u32 %s69, 1
          %s231 = scalar_lea.vmem [#allocation5], %s230
          %233 = dma.done %s229, 16
        $region40: #{tpu_custom_call.1} parent=35 // pred_fallthru
          _
      $region36: #{tpu_custom_call.1} parent=5 // pred_fallthru
        _
    $region6: #{tpu_custom_call.1} parent=1 // loop_footer
      %s17 = sadd.s32 1, %s13
    $region7: #{tpu_custom_call.1} parent=1 // loop_footer_branch
      %12 = sbr.rel target = $region3
    $region8: #{tpu_custom_call.1} parent=1 // loop_exit
      _
    %234 = vsyncpa [#allocation3], 1
    %s235 = scalar_lea.sflag [#allocation3], 1
    %236 = vsyncpa %s235, 1
    %237 = vsyncpa [#allocation4], 1
    %s238 = scalar_lea.sflag [#allocation4], 1
    %239 = vsyncpa %s238, 1

</llo_original>
